<compile_context>
chip_gen: v5e
topology: v5e:2x2
jax: 0.10.0
libtpu: 0.0.40
codegen_flags: <defaults>
</compile_context>

<pallas_src>
import jax
import jax.numpy as jnp
from jax.experimental import pallas as pl
from jax.experimental.pallas import tpu as pltpu

_LANES = 128
_SUBLANE_BY_ITEMSIZE = {4: 8, 2: 16, 1: 32}


def _make_hfunc_kernel(theta, mu):
    """theta/mu are frozen Python scalars -> bake them into the kernel body."""
    theta = float(theta)
    mu = float(mu)

    def kernel(y_ref, out_ref):
        y = y_ref[...].astype(jnp.float32)
        out_ref[...] = (theta * (mu - y)).astype(out_ref.dtype)

    return kernel


def _target_tile_bytes():
    """~4 MiB tiles on v6e/v7x, ~2 MiB on v5e (or when detection fails)."""
    try:
        kind = jax.devices()[0].device_kind.lower()
    except Exception:  # pragma: no cover - defensive; default to the safe size
        kind = ""
    if "v5" in kind:
        return 2 << 20
    return 4 << 20


def _choose_tile_rows(rows, itemsize, sublane):
    """Pick tile rows for a (rows, 128) slab: big (target_bytes) tiles, sublane
    aligned, capped so the grid has >= 2 blocks when the slab is big enough."""
    target = _target_tile_bytes()
    tr = max(sublane, (target // (_LANES * itemsize) // sublane) * sublane)
    tr = min(tr, rows)
    if rows >= 2 * sublane:
        # Cap at ~half the slab (rounded up to the sublane quantum) so the
        # "parallel" grid axis always has >= 2 blocks for megacore sharding.
        half = ((rows + 1) // 2 + sublane - 1) // sublane * sublane
        tr = min(tr, half)
    return max(1, tr)


def hfunc_forward(t, y, theta=1.0, mu=0.0, *, tile_rows=None,
                  min_pallas_elems=64 * 1024, force_pallas=False):
    """theta * (mu - y), same shape/dtype as y.  t accepted for parity, unused.

    theta / mu must be Python (trace-time) constants, matching the frozen
    nn.Parameters of the torch module.
    """
    del t  # unused by HFunc.forward, kept for signature parity
    theta = float(theta)
    mu = float(mu)
    orig_shape = y.shape
    out_dtype = y.dtype
    total = int(y.size)

    # Tiny inputs (the production shape is ~8x32): launching a kernel is pure
    # overhead; let XLA fuse the elementwise op into the surrounding SDE step.
    if total == 0 or (not force_pallas and total < min_pallas_elems):
        return (theta * (mu - y.astype(jnp.float32))).astype(out_dtype)

    itemsize = jnp.dtype(out_dtype).itemsize
    sublane = _SUBLANE_BY_ITEMSIZE.get(itemsize, 8)

    # Lane-dense slab: flatten, pad the flat tail to a multiple of 128 lanes,
    # view as (rows, 128).  Row-major reshape is free; padded tail is sliced
    # off after the kernel so garbage never reaches the caller.
    rows = pl.cdiv(total, _LANES)
    padded = rows * _LANES
    flat = y.reshape(-1)
    if padded != total:
        flat = jnp.pad(flat, (0, padded - total))
    slab = flat.reshape(rows, _LANES)

    if tile_rows is not None:
        tr = min(int(tile_rows), rows)
        if tr < rows:
            tr = max(sublane, (tr // sublane) * sublane)
    else:
        tr = _choose_tile_rows(rows, itemsize, sublane)

    grid = (pl.cdiv(rows, tr),)
    tile_bytes = tr * _LANES * itemsize
    # 2 buffers x (1 in + 1 out) = 4 tiles; leave ~50% headroom.
    vmem_limit = max(16 << 20, 6 * tile_bytes)

    out_slab = pl.pallas_call(
        _make_hfunc_kernel(theta, mu),
        out_shape=jax.ShapeDtypeStruct((rows, _LANES), out_dtype),
        grid=grid,
        in_specs=[pl.BlockSpec((tr, _LANES), lambda i: (i, 0))],
        out_specs=pl.BlockSpec((tr, _LANES), lambda i: (i, 0)),
        compiler_params=pltpu.CompilerParams(
            dimension_semantics=("parallel",),
            vmem_limit_bytes=vmem_limit),
    )(slab)

    out_flat = out_slab.reshape(-1)
    if padded != total:
        out_flat = out_flat[:total]
    return out_flat.reshape(orig_shape)


def hfunc_reference(t, y, theta=1.0, mu=0.0):
    """Pure-JAX reference mirroring the torch forward (f32 math, y's dtype out)."""
    del t
    return (float(theta) * (float(mu) - y.astype(jnp.float32))).astype(y.dtype)


if __name__ == "__main__":
    key = jax.random.PRNGKey(0)
    k1, k2, k3 = jax.random.split(key, 3)
    t = 0.37

    # 1) Production-like tiny shape (N=8, D=32): default policy -> fused XLA path.
    theta, mu = 1.0, 0.0
    y = jax.random.normal(k1, (8, 32), jnp.float32)
    out = jax.block_until_ready(hfunc_forward(t, y, theta=theta, mu=mu))
    ref = hfunc_reference(t, y, theta=theta, mu=mu)
    assert out.shape == y.shape and out.dtype == y.dtype
    assert jnp.allclose(out, ref, rtol=1e-6, atol=1e-6)

    # 2) Same tiny shape, forced through the Pallas kernel (lane-dense slab,
    #    rows < sublane -> full-extent block, grid=(1,)).
    out_p = jax.block_until_ready(
        hfunc_forward(t, y, theta=theta, mu=mu, force_pallas=True))
    assert out_p.shape == y.shape
    assert jnp.allclose(out_p, ref, rtol=1e-6, atol=1e-6)

    # 3) Larger shape exercising: flat-tail padding (300*48 % 128 != 0),
    #    multi-block "parallel" grid (>= 2 blocks), masked tail block, and the
    #    post-kernel tail slice.
    theta2, mu2 = 0.7, 0.25
    y2 = jax.random.normal(k2, (300, 48), jnp.float32)
    out2 = jax.block_until_ready(
        hfunc_forward(t, y2, theta=theta2, mu=mu2, force_pallas=True))
    ref2 = hfunc_reference(t, y2, theta=theta2, mu=mu2)
    assert out2.shape == y2.shape
    assert jnp.allclose(out2, ref2, rtol=1e-6, atol=1e-6)

    # 4) bf16 input: f32 math in-kernel, cast back to bf16 (dtype-aware tiling).
    y3 = jax.random.normal(k3, (16, 32), jnp.float32).astype(jnp.bfloat16)
    out3 = jax.block_until_ready(
        hfunc_forward(t, y3, theta=theta2, mu=mu2, force_pallas=True))
    ref3 = hfunc_reference(t, y3, theta=theta2, mu=mu2)
    assert out3.shape == y3.shape and out3.dtype == jnp.bfloat16
    assert jnp.allclose(out3.astype(jnp.float32), ref3.astype(jnp.float32),
                        rtol=1e-2, atol=1e-2)

    print("KERNEL_OK")
</pallas_src>

<mosaic_0001>
module attributes {stable_mosaic.version = 11 : i64} {
  func.func @kernel(%arg0: i32, %arg1: memref<2x128xf32, #tpu.memory_space<vmem>>, %arg2: memref<2x128xf32, #tpu.memory_space<vmem>>) attributes {dimension_semantics = [#tpu.dimension_semantics<parallel>], iteration_bounds = array<i64: 1>, scalar_prefetch = 0 : i64, scratch_operands = 0 : i64, tpu.core_type = #tpu.core_type<tc>, window_params = [{transform_indices = @transform_0, window_bounds = array<i64: 2, 128>}, {transform_indices = @transform_1, window_bounds = array<i64: 2, 128>}]} {
    %c0 = arith.constant 0 : index
    %c0_0 = arith.constant 0 : index
    %0 = vector.load %arg1[%c0, %c0_0] : memref<2x128xf32, #tpu.memory_space<vmem>>, vector<2x128xf32>
    %cst = arith.constant 0.000000e+00 : f32
    %1 = vector.broadcast %cst : f32 to vector<2x128xf32>
    %2 = arith.subf %1, %0 : vector<2x128xf32>
    %cst_1 = arith.constant 1.000000e+00 : f32
    %3 = vector.broadcast %cst_1 : f32 to vector<2x128xf32>
    %4 = arith.mulf %3, %2 : vector<2x128xf32>
    %c0_2 = arith.constant 0 : index
    %c0_3 = arith.constant 0 : index
    %5 = vector.load %arg2[%c0_2, %c0_3] : memref<2x128xf32, #tpu.memory_space<vmem>>, vector<2x128xf32>
    tpu.vector_store %arg2[%c0_2, %c0_3], %4 {strides = array<i32>} : memref<2x128xf32, #tpu.memory_space<vmem>>, vector<2x128xf32>,
    return
  }
  func.func @transform_0(%arg0: i32) -> (i32, i32) {
    %c0_i32 = arith.constant 0 : i32
    %c0_i32_0 = arith.constant 0 : i32
    return %arg0, %c0_i32 : i32, i32
  }
  func.func @transform_1(%arg0: i32) -> (i32, i32) {
    %c0_i32 = arith.constant 0 : i32
    %c0_i32_0 = arith.constant 0 : i32
    return %arg0, %c0_i32 : i32, i32
  }
}

</mosaic_0001>

<llo_original>
// kernel: tpu_custom_call.1
$region0: #{tpu_custom_call.1}
  #allocation0 [shape = 'u32[]', space=smem, size = 0x4, offset = 0x4, fixed_abs, tag = 'smem constant byte address 0x4 - core index']
  #allocation1 [shape = 'u32[72,128]{1,0:T(1,128)}', space=vmem, size = 0x9000, scoped, tag = 'internal scratch']
  %s0 = inlined_call_operand.hbm [shape: f32[2,128], index: 0, kind: input, shape index: {}]
  %s1 = inlined_call_operand.hbm [shape: f32[2,128], index: 1, kind: output, shape index: {}]
  %s2 = sld [smem:[#allocation0]]
  $region18: #{tpu_custom_call.1} parent=0
    _
  %s4 = ssub.s32 1, %s2
  %s5 = scalar_select 0, %s4, %s2
  $region1: #{tpu_custom_call.1} parent=0
    #allocation2 [shape = 'u8[1024]{0}', space=vmem, size = 0x400, scoped, tag = 'input window, operand 0, single buffered']
    #allocation3 [shape = 's32[1]{0}', space=sflag, size = 0x4, scoped, tag = 'scoped memory for tpu_custom_call.1']
    #allocation4 [shape = 's32[1]{0}', space=sflag, size = 0x4, scoped, tag = 'scoped memory for tpu_custom_call.1']
    #allocation5 [shape = 'u8[1024]{0}', space=vmem, size = 0x400, scoped, tag = 'output window, operand 0, single buffered']
    %6 = vsyncpa [#allocation3], 0
    %7 = vsyncpa [#allocation4], 0
    // Predicated region
    $region2: #{tpu_custom_call.1} parent=1 // pred_check
      _
    $region3: #{tpu_custom_call.1} parent=1 // pred_check_branch
      %9 = sbr.rel (0) target = $region5
    $region4: #{tpu_custom_call.1} parent=1 // pred_region
      %11 = vsyncadd [#allocation3], 0
      %s13 = sshll.u32 %s0, 4
      %s14 = int_to_ptr.hbm [resolvable:$true] %s13
      %s15 = sshll.u32 [#allocation2], 4
      %s16 = int_to_ptr.vmem [resolvable:$true] %s15
      %18 = dma.hbm_to_vmem [thread:$0]  %s14, 32, %s16, [#allocation3]
    $region5: #{tpu_custom_call.1} parent=1 // pred_fallthru
      _
    // Predicated region
    $region6: #{tpu_custom_call.1} parent=1 // pred_check
      _
    $region7: #{tpu_custom_call.1} parent=1 // pred_check_branch
      %20 = sbr.rel (0) target = $region9
    $region8: #{tpu_custom_call.1} parent=1 // pred_region
      %22 = dma.done [#allocation3], 32
    $region9: #{tpu_custom_call.1} parent=1 // pred_fallthru
      _
    %v23 = vld [vmem:[#allocation2] sm:$0x3]
    %v24 = vsub.f32 0.0, %v23
    %25 = vst [vmem:[#allocation5] sm:$0x3] %v24
    // Predicated region
    $region10: #{tpu_custom_call.1} parent=1 // pred_check
      _
    $region11: #{tpu_custom_call.1} parent=1 // pred_check_branch
      %27 = sbr.rel (0) target = $region13
    $region12: #{tpu_custom_call.1} parent=1 // pred_region
      %29 = vsyncadd [#allocation4], 0
      %s31 = sshll.u32 [#allocation5], 4
      %s32 = int_to_ptr.vmem [resolvable:$true] %s31
      %s33 = sshll.u32 %s1, 4
      %s34 = int_to_ptr.hbm [resolvable:$true] %s33
      %36 = dma.vmem_to_hbm [thread:$0]  %s32, 32, %s34, [#allocation4]
    $region13: #{tpu_custom_call.1} parent=1 // pred_fallthru
      _
    // Predicated region
    $region14: #{tpu_custom_call.1} parent=1 // pred_check
      _
    $region15: #{tpu_custom_call.1} parent=1 // pred_check_branch
      %38 = sbr.rel (0) target = $region17
    $region16: #{tpu_custom_call.1} parent=1 // pred_region
      %40 = dma.done [#allocation4], 32
    $region17: #{tpu_custom_call.1} parent=1 // pred_fallthru
      _
    %41 = vsyncpa [#allocation3], 1
    %42 = vsyncpa [#allocation4], 1

</llo_original>
